<compile_context>
chip_gen: v6e
topology: v6e:2x2x1
jax: 0.10.0
libtpu: 0.0.40
codegen_flags: <defaults>
</compile_context>

<pallas_src>
import functools

import jax
import jax.numpy as jnp
from jax.experimental import pallas as pl
from jax.experimental.pallas import tpu as pltpu

_MiB = 1 << 20


# ------------------------------- small helpers ------------------------------
def _vmem_limit(est_bytes):
    # Above every generation's default scoped limit (16 MiB v5e / 32 MiB
    # v6e+v7x) but never above v7x's 64 MiB physical VMEM.
    return int(min(64 * _MiB, max(32 * _MiB, int(1.25 * est_bytes) + 4 * _MiB)))


def _pick_dst_tile(n, requested, per_cell_bytes, budget_bytes=40 * _MiB):
    """Largest dst-row tile whose [T, N]-scaled VMEM footprint fits a budget."""
    t = min(requested, n)
    while t > 8 and t * n * per_cell_bytes > budget_bytes:
        t = max(8, (t // 2) // 8 * 8)
    return t


def _attn_block_diag(attn):
    """[H, D] per-head attention vectors -> [H*D, H] block-diagonal matrix."""
    h, d = attn.shape
    eye = jnp.eye(h, dtype=attn.dtype)
    return (attn[:, :, None] * eye[:, None, :]).reshape(h * d, h)


def _pad_cols(x, pad):
    return x if pad == 0 else jnp.pad(x, ((0, 0), (0, pad)))


# -------------- linear projection + graph-residual source (x*norm) ----------
def _linear_scaled_kernel(x_ref, w_ref, norm_ref, y_ref, ys_ref):
    y = jnp.dot(x_ref[...], w_ref[...], preferred_element_type=jnp.float32)
    y_ref[...] = y
    # residual source for norm * (A @ (y*norm)), pre-scaled + bf16 once here
    ys_ref[...] = (y * norm_ref[...]).astype(jnp.bfloat16)


def pallas_linear_scaled(x, w, norm, *, tm=512):
    """Returns (x @ w) as f32 and ((x @ w) * norm) as bf16, row-tiled."""
    n, fin = x.shape
    fo = w.shape[1]
    t = min(tm, n)
    return pl.pallas_call(
        _linear_scaled_kernel,
        out_shape=(jax.ShapeDtypeStruct((n, fo), jnp.float32),
                   jax.ShapeDtypeStruct((n, fo), jnp.bfloat16)),
        grid=(pl.cdiv(n, t),),
        in_specs=[pl.BlockSpec((t, fin), lambda i: (i, 0)),
                  pl.BlockSpec((fin, fo), lambda i: (0, 0)),
                  pl.BlockSpec((t, 1), lambda i: (i, 0))],
        out_specs=(pl.BlockSpec((t, fo), lambda i: (i, 0)),
                   pl.BlockSpec((t, fo), lambda i: (i, 0))),
        compiler_params=pltpu.CompilerParams(dimension_semantics=("parallel",)),
    )(x, w, norm)


# ------------- fused per-layer projection + attention logits (el/er) --------
def _proj_attn_kernel(x_ref, w_ref, albd_ref, arbd_ref, feat_ref, el_ref, er_ref):
    feat = jnp.dot(x_ref[...], w_ref[...], preferred_element_type=jnp.float32)
    feat_ref[...] = feat.astype(jnp.bfloat16)             # bf16 feat for AV matmul
    # batched per-head logits: one MXU matmul each instead of H per-tile passes
    el_ref[...] = jnp.dot(feat, albd_ref[...], preferred_element_type=jnp.float32)
    er_ref[...] = jnp.dot(feat, arbd_ref[...], preferred_element_type=jnp.float32)


def gat_projection(x, w_flat, albd, arbd, *, tm=512):
    n, fin = x.shape
    hd = w_flat.shape[1]
    h = albd.shape[1]
    t = min(tm, n)
    return pl.pallas_call(
        _proj_attn_kernel,
        out_shape=(jax.ShapeDtypeStruct((n, hd), jnp.bfloat16),
                   jax.ShapeDtypeStruct((n, h), jnp.float32),
                   jax.ShapeDtypeStruct((n, h), jnp.float32)),
        grid=(pl.cdiv(n, t),),
        in_specs=[pl.BlockSpec((t, fin), lambda i: (i, 0)),
                  pl.BlockSpec((fin, hd), lambda i: (0, 0)),
                  pl.BlockSpec((hd, h), lambda i: (0, 0)),
                  pl.BlockSpec((hd, h), lambda i: (0, 0))],
        out_specs=(pl.BlockSpec((t, hd), lambda i: (i, 0)),
                   pl.BlockSpec((t, h), lambda i: (i, 0)),
                   pl.BlockSpec((t, h), lambda i: (i, 0))),
        compiler_params=pltpu.CompilerParams(dimension_semantics=("parallel",)),
    )(x, w_flat, albd, arbd)


# ------------------- hoisted graph-residual: norm*(A @ xs) ------------------
def _graph_res_kernel(adj_ref, xs_ref, norm_dst_ref, o_ref):
    # bf16 x bf16 -> f32: native MXU path, no in-kernel casts of the adj slab.
    agg = jnp.dot(adj_ref[...], xs_ref[...], preferred_element_type=jnp.float32)
    o_ref[...] = agg * norm_dst_ref[...]


def graph_residual(adj_bf16, xs_bf16, norm, *, dst_tile=512):
    """norm * (A @ xs) where xs = (x * norm) was precomputed in bf16."""
    n, c = xs_bf16.shape
    t = _pick_dst_tile(n, dst_tile, per_cell_bytes=5)
    est = (2 * t * n * 2          # adj bf16, double-buffered
           + 2 * n * c * 2        # xs bf16 (resident)
           + 2 * t * 4 + 4 * t * c * 4)
    return pl.pallas_call(
        _graph_res_kernel,
        out_shape=jax.ShapeDtypeStruct((n, c), jnp.float32),
        grid=(pl.cdiv(n, t),),
        in_specs=[pl.BlockSpec((t, n), lambda i: (i, 0)),    # adj dst-row tile
                  pl.BlockSpec((n, c), lambda i: (0, 0)),    # xs (all src rows)
                  pl.BlockSpec((t, 1), lambda i: (i, 0))],   # norm (dst tile)
        out_specs=pl.BlockSpec((t, c), lambda i: (i, 0)),
        compiler_params=pltpu.CompilerParams(
            dimension_semantics=("parallel",),
            vmem_limit_bytes=_vmem_limit(est)),
    )(adj_bf16, xs_bf16, norm)


# --------------------- fused GATConv + residual-add kernel ------------------
def _gat_attention_kernel(feat_ref, elt_ref, er_ref, adj_ref, res_ref, out_ref,
                          *, num_heads, head_dim, negative_slope, apply_elu):
    feat = feat_ref[...]                         # [N, H*D] bf16 (all src rows)
    elt = elt_ref[...]                           # [H, N]   f32  (src logits)
    er = er_ref[...]                             # [T, H]   f32  (dst logits)
    mask = adj_ref[...] > 0                      # boolean edge mask (shared)

    outs = []
    for h in range(num_heads):                   # static unrolled head loop
        lo = h * head_dim
        e = er[:, h:h + 1] + elt[h:h + 1, :]     # e[dst, src]  [T, N]
        e = jnp.where(e > 0, e, negative_slope * e)      # leaky_relu
        e = jnp.where(mask, e, -1e30)                    # mask non-edges
        e = e - jnp.max(e, axis=-1, keepdims=True)
        p = jnp.exp(e)                                   # masked -> exactly 0
        denom = jnp.maximum(jnp.sum(p, axis=-1, keepdims=True), 1e-20)
        alpha = (p * pl.reciprocal(denom, approx=True)).astype(jnp.bfloat16)
        outs.append(jnp.dot(alpha, feat[:, lo:lo + head_dim],
                            preferred_element_type=jnp.float32))   # [T, D] f32
    o = outs[0] if num_heads == 1 else jnp.concatenate(outs, axis=1)  # [T, H*D]
    o = o + res_ref[...]                                # one dense residual add
    if apply_elu:
        o = jnp.where(o > 0, o, jnp.exp(jnp.minimum(o, 0.0)) - 1.0)   # F.elu
    out_ref[...] = o                                     # lane-dense store


def gat_gres_layer(prev, w_flat, attn_l, attn_r, adj_bf16, res_pre, *,
                   num_heads, negative_slope=0.2, apply_elu=True, dst_tile=512):
    """One GResConv(FlattenedConv(GATConv)) layer with precomputed residual."""
    n = prev.shape[0]
    hd = w_flat.shape[1]
    head_dim = hd // num_heads

    # Fused projection + batched per-head attention logits.
    albd = _attn_block_diag(attn_l)                      # [H*D, H]
    arbd = _attn_block_diag(attn_r)
    feat_bf16, el, er = gat_projection(prev, w_flat, albd, arbd)
    el_t = el.T                                          # [H, N] once per layer

    t = _pick_dst_tile(n, dst_tile, per_cell_bytes=20)
    est = (2 * (n * hd * 2 + num_heads * n * 4)          # resident feat + el_t
           + 2 * (t * n * 2 + t * num_heads * 4 + 2 * t * hd * 4)
           + 4 * t * n * 4)                              # in-kernel f32 temps
    kernel = functools.partial(_gat_attention_kernel,
                               num_heads=num_heads, head_dim=head_dim,
                               negative_slope=negative_slope,
                               apply_elu=apply_elu)
    return pl.pallas_call(
        kernel,
        out_shape=jax.ShapeDtypeStruct((n, hd), jnp.float32),
        grid=(pl.cdiv(n, t),),
        in_specs=[
            pl.BlockSpec((n, hd), lambda i: (0, 0)),          # feat bf16 (src)
            pl.BlockSpec((num_heads, n), lambda i: (0, 0)),   # el_t [H, N]
            pl.BlockSpec((t, num_heads), lambda i: (i, 0)),   # er dst tile
            pl.BlockSpec((t, n), lambda i: (i, 0)),           # adj dst tile
            pl.BlockSpec((t, hd), lambda i: (i, 0)),          # residual dst tile
        ],
        out_specs=pl.BlockSpec((t, hd), lambda i: (i, 0)),
        compiler_params=pltpu.CompilerParams(
            dimension_semantics=("parallel",),
            vmem_limit_bytes=_vmem_limit(est)),
    )(feat_bf16, el_t, er, adj_bf16, res_pre)


# ------------------------------- full network -------------------------------
def gat_gresnet_forward(features, params, adj, norm):
    adj_bf16 = adj.astype(jnp.bfloat16)          # 0/1 exact in bf16, halves DMA
    num_heads = params["num_heads"]
    norm = norm.reshape(-1, 1).astype(jnp.float32)

    # raw = raw_in_proj(features); also emit (raw*norm) bf16 for the residual.
    raw, raw_norm_bf16 = pallas_linear_scaled(features, params["raw_in_proj"], norm)
    # graph_res residual is identical for every hidden layer: compute once.
    res_hidden = graph_residual(adj_bf16, raw_norm_bf16, norm)     # [N, hid*H]

    h = features
    for layer in params["layers"]:
        h = gat_gres_layer(h, layer["w_flat"], layer["attn_l"], layer["attn_r"],
                           adj_bf16, res_hidden, num_heads=num_heads,
                           negative_slope=0.2, apply_elu=True)

    # Output layer (1 head, no activation): zero-pad feature width to a 128
    # multiple so every intermediate / output store is lane-dense.
    out_dim = params["raw_out_proj"].shape[1]
    pad = (-out_dim) % 128
    w_out_proj = _pad_cols(params["raw_out_proj"], pad)
    ol = params["out_layer"]
    w_out = _pad_cols(ol["w_flat"], pad)
    al_out = _pad_cols(ol["attn_l"], pad)
    ar_out = _pad_cols(ol["attn_r"], pad)

    _, raw_out_norm_bf16 = pallas_linear_scaled(raw, w_out_proj, norm)
    res_out = graph_residual(adj_bf16, raw_out_norm_bf16, norm)    # [N, pad_out]
    out_pad = gat_gres_layer(h, w_out, al_out, ar_out, adj_bf16, res_out,
                             num_heads=1, negative_slope=0.2, apply_elu=False)
    return out_pad[:, :out_dim]


# ------------------------- pure-JAX f32 reference ---------------------------
def reference_forward(features, params, adj, norm):
    heads = params["num_heads"]

    def graph_res(x):
        return norm * (adj @ (x * norm))

    def gat_layer(prev, w, al, ar, res, nh, elu):
        n = prev.shape[0]
        feat = prev @ w
        d = w.shape[1] // nh
        fh = feat.reshape(n, nh, d)
        el = jnp.einsum("nhd,hd->nh", fh, al)
        er = jnp.einsum("nhd,hd->nh", fh, ar)
        outs = []
        for hh in range(nh):
            e = er[:, hh][:, None] + el[:, hh][None, :]
            e = jnp.where(e > 0, e, 0.2 * e)
            e = jnp.where(adj > 0, e, -jnp.inf)
            a = jax.nn.softmax(e, axis=-1)
            outs.append(a @ fh[:, hh, :])
        o = jnp.concatenate(outs, axis=1) + res
        return jax.nn.elu(o) if elu else o

    raw = features @ params["raw_in_proj"]
    res_h = graph_res(raw)
    h = features
    for layer in params["layers"]:
        h = gat_layer(h, layer["w_flat"], layer["attn_l"], layer["attn_r"],
                      res_h, heads, True)
    raw_out = raw @ params["raw_out_proj"]
    res_o = graph_res(raw_out)
    ol = params["out_layer"]
    return gat_layer(h, ol["w_flat"], ol["attn_l"], ol["attn_r"], res_o, 1, False)


# ---------------------------- deterministic params --------------------------
def init_params(key, in_dim, hidden_dim, out_dim, n_layers, num_heads):
    kit = iter(jax.random.split(key, 4 + 3 * (n_layers + 1)))

    def nrm(shape, scale=0.1):
        return scale * jax.random.normal(next(kit), shape, dtype=jnp.float32)

    params = {
        "num_heads": num_heads,
        "raw_in_proj": nrm((in_dim, hidden_dim * num_heads)),
        "raw_out_proj": nrm((hidden_dim * num_heads, out_dim)),
        "layers": [],
    }
    fin = in_dim
    for _ in range(n_layers):
        params["layers"].append({
            "w_flat": nrm((fin, hidden_dim * num_heads)),   # [Fin, H*D]
            "attn_l": nrm((num_heads, hidden_dim)),         # [H, D]
            "attn_r": nrm((num_heads, hidden_dim)),
        })
        fin = hidden_dim * num_heads
    params["out_layer"] = {
        "w_flat": nrm((hidden_dim * num_heads, out_dim)),   # [H*hid, out]
        "attn_l": nrm((1, out_dim)),
        "attn_r": nrm((1, out_dim)),
    }
    return params


if __name__ == "__main__":
    N, IN_DIM, HIDDEN, HEADS, OUT_DIM, N_LAYERS = 32, 16, 16, 8, 8, 2

    key = jax.random.PRNGKey(0)
    k_feat, k_param = jax.random.split(key)
    features = jax.random.normal(k_feat, (N, IN_DIM), dtype=jnp.float32)

    # Deterministic small graph: self-loops + two ring edge sets (src -> dst),
    # so every node has in-degree >= 1 (matches DGL's zero-in-degree check).
    idx = jnp.arange(N)
    adj = jnp.zeros((N, N), dtype=jnp.float32)
    adj = adj.at[idx, idx].set(1.0)
    adj = adj.at[(idx + 1) % N, idx].set(1.0)
    adj = adj.at[(idx + 3) % N, idx].set(1.0)
    in_deg = jnp.sum(adj, axis=1)
    norm = jnp.power(jnp.maximum(in_deg, 1.0), -0.5).reshape(N, 1).astype(jnp.float32)

    params = init_params(k_param, IN_DIM, HIDDEN, OUT_DIM, N_LAYERS, HEADS)

    out = gat_gresnet_forward(features, params, adj, norm)
    out = jax.block_until_ready(out)
    assert out.shape == (N, OUT_DIM), out.shape
    assert bool(jnp.all(jnp.isfinite(out)))

    # Tolerance check vs. f32 reference (bf16 feat/alpha/adj + approx recip).
    ref = reference_forward(features, params, adj, norm)
    err = float(jnp.max(jnp.abs(out - ref)))
    assert err < 1e-1, f"max abs err vs reference: {err}"
    print("KERNEL_OK")
</pallas_src>

<mosaic_0001>
module attributes {stable_mosaic.version = 11 : i64} {
  func.func @_linear_scaled_kernel(%arg0: i32, %arg1: memref<32x16xf32, #tpu.memory_space<vmem>>, %arg2: memref<16x128xf32, #tpu.memory_space<vmem>>, %arg3: memref<32x1xf32, #tpu.memory_space<vmem>>, %arg4: memref<32x128xf32, #tpu.memory_space<vmem>>, %arg5: memref<32x128xbf16, #tpu.memory_space<vmem>>) attributes {dimension_semantics = [#tpu.dimension_semantics<parallel>], iteration_bounds = array<i64: 1>, scalar_prefetch = 0 : i64, scratch_operands = 0 : i64, tpu.core_type = #tpu.core_type<tc>, window_params = [{transform_indices = @transform_0, window_bounds = array<i64: 32, 16>}, {pipeline_mode = #tpu.pipeline_mode<synchronous>, transform_indices = @transform_1, window_bounds = array<i64: 16, 128>}, {transform_indices = @transform_2, window_bounds = array<i64: 32, 1>}, {transform_indices = @transform_3, window_bounds = array<i64: 32, 128>}, {transform_indices = @transform_4, window_bounds = array<i64: 32, 128>}]} {
    %c0 = arith.constant 0 : index
    %c0_0 = arith.constant 0 : index
    %0 = vector.load %arg1[%c0, %c0_0] : memref<32x16xf32, #tpu.memory_space<vmem>>, vector<32x16xf32>
    %c0_1 = arith.constant 0 : index
    %c0_2 = arith.constant 0 : index
    %1 = vector.load %arg2[%c0_1, %c0_2] : memref<16x128xf32, #tpu.memory_space<vmem>>, vector<16x128xf32>
    %cst = arith.constant dense<0.000000e+00> : vector<32x128xf32>
    %2 = tpu.matmul %0, %1, %cst {dimension_numbers = #tpu.dot_dimension_numbers<[1], [0], [0], [1], [0, 0, 1, 1], [], []>} : vector<32x16xf32>, vector<16x128xf32>, vector<32x128xf32> -> vector<32x128xf32>
    %c0_3 = arith.constant 0 : index
    %c0_4 = arith.constant 0 : index
    %3 = vector.load %arg4[%c0_3, %c0_4] : memref<32x128xf32, #tpu.memory_space<vmem>>, vector<32x128xf32>
    tpu.vector_store %arg4[%c0_3, %c0_4], %2 {strides = array<i32>} : memref<32x128xf32, #tpu.memory_space<vmem>>, vector<32x128xf32>,
    %c0_5 = arith.constant 0 : index
    %c0_6 = arith.constant 0 : index
    %4 = vector.load %arg3[%c0_5, %c0_6] : memref<32x1xf32, #tpu.memory_space<vmem>>, vector<32x1xf32>
    %5 = vector.broadcast %4 : vector<32x1xf32> to vector<32x128xf32>
    %6 = arith.mulf %2, %5 : vector<32x128xf32>
    %7 = arith.truncf %6 : vector<32x128xf32> to vector<32x128xbf16>
    %c0_7 = arith.constant 0 : index
    %c0_8 = arith.constant 0 : index
    %8 = vector.load %arg5[%c0_7, %c0_8] : memref<32x128xbf16, #tpu.memory_space<vmem>>, vector<32x128xbf16>
    tpu.vector_store %arg5[%c0_7, %c0_8], %7 {strides = array<i32>} : memref<32x128xbf16, #tpu.memory_space<vmem>>, vector<32x128xbf16>,
    return
  }
  func.func @transform_0(%arg0: i32) -> (i32, i32) {
    %c0_i32 = arith.constant 0 : i32
    %c0_i32_0 = arith.constant 0 : i32
    return %arg0, %c0_i32 : i32, i32
  }
  func.func @transform_1(%arg0: i32) -> (i32, i32) {
    %c0_i32 = arith.constant 0 : i32
    %c0_i32_0 = arith.constant 0 : i32
    %c0_i32_1 = arith.constant 0 : i32
    return %c0_i32, %c0_i32_0 : i32, i32
  }
  func.func @transform_2(%arg0: i32) -> (i32, i32) {
    %c0_i32 = arith.constant 0 : i32
    %c0_i32_0 = arith.constant 0 : i32
    return %arg0, %c0_i32 : i32, i32
  }
  func.func @transform_3(%arg0: i32) -> (i32, i32) {
    %c0_i32 = arith.constant 0 : i32
    %c0_i32_0 = arith.constant 0 : i32
    return %arg0, %c0_i32 : i32, i32
  }
  func.func @transform_4(%arg0: i32) -> (i32, i32) {
    %c0_i32 = arith.constant 0 : i32
    %c0_i32_0 = arith.constant 0 : i32
    return %arg0, %c0_i32 : i32, i32
  }
}

</mosaic_0001>

<llo_original>
// kernel: tpu_custom_call.1
$region0: #{tpu_custom_call.1}
  #allocation0 [shape = 'u32[]', space=smem, size = 0x4, offset = 0x4, fixed_abs, tag = 'smem constant byte address 0x4 - core index']
  #allocation1 [shape = 'u32[144,128]{1,0:T(1,128)}', space=vmem, size = 0x12000, scoped, tag = 'internal scratch']
  %s0 = inlined_call_operand.vmem [shape: f32[32,16], index: 0, kind: input, shape index: {}]
  %s1 = inlined_call_operand.vmem [shape: f32[16,128], index: 1, kind: input, shape index: {}]
  %s2 = inlined_call_operand.vmem [shape: f32[32,1], index: 2, kind: input, shape index: {}]
  %s3 = inlined_call_operand.hbm [shape: f32[32,128], index: 3, kind: output, shape index: {0}]
  %s4 = inlined_call_operand.hbm [shape: bf16[32,128], index: 4, kind: output, shape index: {1}]
  %5 = xla_tuple %s3, %s4
  %s6 = sld [smem:[#allocation0]]
  $region30: #{tpu_custom_call.1} parent=0
    _
  %s8 = ssub.s32 1, %s6
  %s9 = scalar_select 0, %s8, %s6
  $region1: #{tpu_custom_call.1} parent=0
    #allocation2 [shape = 'u8[16384]{0}', space=vmem, size = 0x4000, scoped, tag = 'output window, operand 0, single buffered']
    #allocation3 [shape = 's32[1]{0}', space=sflag, size = 0x4, scoped, tag = 'scoped memory for tpu_custom_call.1']
    #allocation4 [shape = 'u8[8192]{0}', space=vmem, size = 0x2000, scoped, tag = 'output window, operand 1, single buffered']
    #allocation5 [shape = 's32[1]{0}', space=sflag, size = 0x4, scoped, tag = 'scoped memory for tpu_custom_call.1']
    %10 = vsyncpa [#allocation3], 0
    %11 = vsyncpa [#allocation5], 0
    // Predicated region
    $region2: #{tpu_custom_call.1} parent=1 // pred_check
      _
    $region3: #{tpu_custom_call.1} parent=1 // pred_check_branch
      %13 = sbr.rel (0) target = $region5
    $region4: #{tpu_custom_call.1} parent=1 // pred_region
      _
    $region5: #{tpu_custom_call.1} parent=1 // pred_fallthru
      _
    // Predicated region
    $region6: #{tpu_custom_call.1} parent=1 // pred_check
      _
    $region7: #{tpu_custom_call.1} parent=1 // pred_check_branch
      %15 = sbr.rel (0) target = $region9
    $region8: #{tpu_custom_call.1} parent=1 // pred_region
      _
    $region9: #{tpu_custom_call.1} parent=1 // pred_fallthru
      _
    // Predicated region
    $region10: #{tpu_custom_call.1} parent=1 // pred_check
      _
    $region11: #{tpu_custom_call.1} parent=1 // pred_check_branch
      %17 = sbr.rel (0) target = $region13
    $region12: #{tpu_custom_call.1} parent=1 // pred_region
      _
    $region13: #{tpu_custom_call.1} parent=1 // pred_fallthru
      _
    %v18 = vld [vmem:[%s0] sm:$0xff]
    %v19 = vld [vmem:[%s0 + $0x8] sm:$0xff]
    %v20 = vld [vmem:[%s0 + $0x10] sm:$0xff]
    %v21 = vld [vmem:[%s0 + $0x18] sm:$0xff]
    %v22 = vld [vmem:[%s1] sm:$0xff]
    %v23 = vld [vmem:[%s1 + $0x8] sm:$0xff]
    %vm24 = vcmask 130048
    %v26 = vsel %vm24, %v18, 0
    %v29 = vsel %vm24, %v19, 0
    %v32 = vsel %vm24, %v20, 0
    %v35 = vsel %vm24, %v21, 0
    %37 = vmatprep.subr.mxu0 0.0
    %38 = vmatpush1.msra.mxu0 0.0
    %39 = vmatprep.subr.mxu0 0.0
    %40 = vmatpush1.msra.mxu0 0.0
    %41 = vmatprep.subr.mxu0 0.0
    %42 = vmatpush1.msra.mxu0 0.0
    %43 = vmatprep.subr.mxu0 0.0
    %44 = vmatpush1.msra.mxu0 0.0
    %45 = vmatprep.subr.mxu0 0.0
    %46 = vmatpush1.msra.mxu0 0.0
    %47 = vmatprep.subr.mxu0 0.0
    %48 = vmatpush1.msra.mxu0 0.0
    %49 = vmatprep.subr.mxu0 0.0
    %50 = vmatpush1.msra.mxu0 0.0
    %51 = vmatprep.subr.mxu0 0.0
    %52 = vmatpush1.msra.mxu0 0.0
    %53 = vmatprep.subr.mxu0 0.0
    %54 = vmatpush1.msra.mxu0 0.0
    %55 = vmatprep.subr.mxu0 0.0
    %56 = vmatpush1.msra.mxu0 0.0
    %57 = vmatprep.subr.mxu0 0.0
    %58 = vmatpush1.msra.mxu0 0.0
    %59 = vmatprep.subr.mxu0 0.0
    %60 = vmatpush1.msra.mxu0 0.0
    %61 = vmatprep.subr.mxu0 0.0
    %62 = vmatpush1.msra.mxu0 0.0
    %63 = vmatprep.subr.mxu0 0.0
    %64 = vmatpush1.msra.mxu0 0.0
    %65 = vmatprep.subr.mxu0 0.0
    %66 = vmatpush1.msra.mxu0 %v23
    %67 = vmatprep.subr.mxu0 0.0
    %68 = vmatpush1.msra.mxu0 %v22
    %69 = vmatprep.subr.mxu0 0.0
    %70 = vmatpush2.msra.mxu0 0.0
    %71 = vmatprep.subr.mxu0 0.0
    %72 = vmatpush2.msra.mxu0 0.0
    %73 = vmatprep.subr.mxu0 0.0
    %74 = vmatpush2.msra.mxu0 0.0
    %75 = vmatprep.subr.mxu0 0.0
    %76 = vmatpush2.msra.mxu0 0.0
    %77 = vmatprep.subr.mxu0 0.0
    %78 = vmatpush2.msra.mxu0 0.0
    %79 = vmatprep.subr.mxu0 0.0
    %80 = vmatpush2.msra.mxu0 0.0
    %81 = vmatprep.subr.mxu0 0.0
    %82 = vmatpush2.msra.mxu0 0.0
    %83 = vmatprep.subr.mxu0 0.0
    %84 = vmatpush2.msra.mxu0 0.0
    %85 = vmatprep.subr.mxu0 0.0
    %86 = vmatpush2.msra.mxu0 0.0
    %87 = vmatprep.subr.mxu0 0.0
    %88 = vmatpush2.msra.mxu0 0.0
    %89 = vmatprep.subr.mxu0 0.0
    %90 = vmatpush2.msra.mxu0 0.0
    %91 = vmatprep.subr.mxu0 0.0
    %92 = vmatpush2.msra.mxu0 0.0
    %93 = vmatprep.subr.mxu0 0.0
    %94 = vmatpush2.msra.mxu0 0.0
    %95 = vmatprep.subr.mxu0 0.0
    %96 = vmatpush2.msra.mxu0 0.0
    %97 = vmatprep.subr.mxu0 0.0
    %98 = vmatpush2.msra.mxu0 0.0
    %99 = vmatprep.subr.mxu0 0.0
    %100 = vmatpush2.msra.mxu0 0.0
    %101 = vmatprep.mubr.f32.mxu0 0.0
    %102 = vmatmul.mubr.f32.gmra.mxu0 %v26
    %v103 = vpop.f32.mrf.mxu0
    %v104 = vadd.f32 0.0, %v103
    %v105 = vpop.f32.mrf.mxu0
    %106 = vmatprep.mubr.f32.mxu0 0.0
    %107 = vmatmul.mubr.f32.gmra.mxu0 %v29
    %v108 = vpop.f32.mrf.mxu0
    %v109 = vadd.f32 0.0, %v108
    %v110 = vpop.f32.mrf.mxu0
    %111 = vmatprep.mubr.f32.mxu0 0.0
    %112 = vmatmul.mubr.f32.gmra.mxu0 %v32
    %v113 = vpop.f32.mrf.mxu0
    %v114 = vadd.f32 0.0, %v113
    %v115 = vpop.f32.mrf.mxu0
    %116 = vmatprep.mubr.f32.mxu0 0.0
    %117 = vmatmul.mubr.f32.gmra.mxu0 %v35
    %v118 = vpop.f32.mrf.mxu0
    %v119 = vadd.f32 0.0, %v118
    %v120 = vpop.f32.mrf.mxu0
    %121 = vdwg.mxu0
    %122 = vst [vmem:[#allocation2] sm:$0xff] %v104
    %123 = vst [vmem:[#allocation2 + $0x8] sm:$0xff] %v109
    %124 = vst [vmem:[#allocation2 + $0x10] sm:$0xff] %v114
    %125 = vst [vmem:[#allocation2 + $0x18] sm:$0xff] %v119
    %v126 = vld [vmem:[%s2] sm:$0xff]
    %v127 = vld [vmem:[%s2 + $0x8] sm:$0xff]
    %v128 = vld [vmem:[%s2 + $0x10] sm:$0xff]
    %v129 = vld [vmem:[%s2 + $0x18] sm:$0xff]
    %131 = vset.pattern.permute.xlu0 0
    %132 = vperm.xlu0 %131, %v126
    %v133 = vpop.permute.xlu0 %132
    %136 = vset.pattern.permute.xlu0 0
    %137 = vperm.xlu0 %136, %v127
    %v138 = vpop.permute.xlu0 %137
    %141 = vset.pattern.permute.xlu0 0
    %142 = vperm.xlu0 %141, %v128
    %v143 = vpop.permute.xlu0 %142
    %146 = vset.pattern.permute.xlu0 0
    %147 = vperm.xlu0 %146, %v129
    %v148 = vpop.permute.xlu0 %147
    %v150 = vmul.f32 %v104, %v133
    %v151 = vmul.f32 %v109, %v138
    %v152 = vmul.f32 %v114, %v143
    %v153 = vmul.f32 %v119, %v148
    %v154 = vpack.c.bf16 %v151, %v150
    %v155 = vpack.c.bf16 %v153, %v152
    %v158 = vunpack.c.l.b16 %v154
    %v159 = vunpack.c.h.b16 %v154
    %v160 = vunpack.c.l.b16 %v155
    %v161 = vunpack.c.h.b16 %v155
    %v162 = vpack.c.b16 %v158, %v158
    %v163 = vpack.c.b16 %v159, %v159
    %v164 = vpack.c.b16 %v160, %v160
    %v165 = vpack.c.b16 %v161, %v161
    %170 = vst [vmem:[#allocation4] sm:$0xf] %v162
    %171 = vst [vmem:[#allocation4 + $0x4] sm:$0xf] %v163
    %172 = vst [vmem:[#allocation4 + $0x8] sm:$0xf] %v164
    %173 = vst [vmem:[#allocation4 + $0xc] sm:$0xf] %v165
    // Predicated region
    $region14: #{tpu_custom_call.1} parent=1 // pred_check
      _
    $region15: #{tpu_custom_call.1} parent=1 // pred_check_branch
      %175 = sbr.rel (0) target = $region17
    $region16: #{tpu_custom_call.1} parent=1 // pred_region
      %s177 = ssub.s32 512, 512
      %178 = vsyncadd [#allocation3], %s177
      %s179 = sshll.u32 [#allocation2], 4
      %s180 = int_to_ptr.vmem [resolvable:$true] %s179
      %185 = dma.vmem_to_hbm [thread:$0]  %s180, 512, %s3, [#allocation3], 128, 128, 8
    $region17: #{tpu_custom_call.1} parent=1 // pred_fallthru
      _
    // Predicated region
    $region18: #{tpu_custom_call.1} parent=1 // pred_check
      _
    $region19: #{tpu_custom_call.1} parent=1 // pred_check_branch
      %187 = sbr.rel (0) target = $region21
    $region20: #{tpu_custom_call.1} parent=1 // pred_region
      %s189 = ssub.s32 256, 256
      %190 = vsyncadd [#allocation5], %s189
      %s191 = sshll.u32 [#allocation4], 4
      %s192 = int_to_ptr.vmem [resolvable:$true] %s191
      %197 = dma.vmem_to_hbm [thread:$0]  %s192, 256, %s4, [#allocation5], 64, 64, 4
    $region21: #{tpu_custom_call.1} parent=1 // pred_fallthru
      _
    // Predicated region
    $region22: #{tpu_custom_call.1} parent=1 // pred_check
      _
    $region23: #{tpu_custom_call.1} parent=1 // pred_check_branch
      %199 = sbr.rel (0) target = $region25
    $region24: #{tpu_custom_call.1} parent=1 // pred_region
      %200 = dma.done [#allocation3], 512
    $region25: #{tpu_custom_call.1} parent=1 // pred_fallthru
      _
    // Predicated region
    $region26: #{tpu_custom_call.1} parent=1 // pred_check
      _
    $region27: #{tpu_custom_call.1} parent=1 // pred_check_branch
      %202 = sbr.rel (0) target = $region29
    $region28: #{tpu_custom_call.1} parent=1 // pred_region
      %203 = dma.done [#allocation5], 256
    $region29: #{tpu_custom_call.1} parent=1 // pred_fallthru
      _
    %204 = vsyncpa [#allocation3], 1
    %205 = vsyncpa [#allocation5], 1

</llo_original>
